<compile_context>
chip_gen: v6e
topology: v6e:2x2x1
jax: 0.10.0
libtpu: 0.0.40
codegen_flags: <defaults>
</compile_context>

<pallas_src>
import jax
import jax.numpy as jnp
from jax.experimental import pallas as pl
from jax.experimental.pallas import tpu as pltpu


_LANE_CHOICES = (1024, 512, 256, 128)   # widest lane-dense last dim that divides total


def _tpu_generation():
    """Best-effort TPU generation (7/6/5/4), 0 if unknown."""
    try:
        kind = jax.devices()[0].device_kind.lower()
    except Exception:
        return 0
    for gen in (7, 6, 5, 4):
        if str(gen) in kind:
            return gen
    return 0


def _affine_kernel(gain_ref, bias_ref, x_ref, o_ref):
    # gain/bias are (1,) f32 scalars in SMEM; compute in f32, store in out dtype.
    g = gain_ref[0]
    b = bias_ref[0]
    o_ref[...] = (x_ref[...].astype(jnp.float32) * g + b).astype(o_ref.dtype)


def _affine_bulk(x2d, gain_f32, bias_f32, tile_rows, vmem_limit_bytes):
    n_rows, lanes = x2d.shape
    itemsize = x2d.dtype.itemsize
    grid = (pl.cdiv(n_rows, tile_rows),)
    return pl.pallas_call(
        _affine_kernel,
        out_shape=jax.ShapeDtypeStruct((n_rows, lanes), x2d.dtype),
        grid_spec=pl.GridSpec(
            grid=grid,
            in_specs=[
                pl.BlockSpec(memory_space=pltpu.MemorySpace.SMEM),      # gain (1,) f32
                pl.BlockSpec(memory_space=pltpu.MemorySpace.SMEM),      # bias (1,) f32
                pl.BlockSpec((tile_rows, lanes), lambda i: (i, 0)),     # x tile
            ],
            out_specs=pl.BlockSpec((tile_rows, lanes), lambda i: (i, 0)),
        ),
        compiler_params=pltpu.CompilerParams(
            dimension_semantics=("parallel",),
            vmem_limit_bytes=vmem_limit_bytes,
        ),
        cost_estimate=pl.CostEstimate(
            flops=2 * n_rows * lanes,
            transcendentals=0,
            bytes_accessed=2 * n_rows * lanes * itemsize,
        ),
    )(gain_f32, bias_f32, x2d)


@jax.jit
def affine(x, gain, bias):
    """x: any-shape float array (NCHW in the reference). gain/bias: shape (1,)."""
    orig_shape = x.shape
    dtype = x.dtype
    total = x.size

    # Scalars stay f32 (32-bit scalar path; matches the f32 parameters of the
    # PyTorch reference).
    gain_f32 = gain.astype(jnp.float32).reshape(1)
    bias_f32 = bias.astype(jnp.float32).reshape(1)

    # Pick the widest lane count that exactly divides the element count so the
    # bulk kernel covers the entire array with zero copies.
    lanes = 0
    for cand in _LANE_CHOICES:
        if total >= cand and total % cand == 0:
            lanes = cand
            break

    if lanes == 0:
        # Unaligned (total % 128 != 0) or tiny/empty input: one fused XLA
        # elementwise (single read + single write) is already optimal and
        # beats any pad/slice/concatenate plumbing around a Pallas call.
        y = (x.astype(jnp.float32) * gain_f32[0] + bias_f32[0]).astype(dtype)
        return y.reshape(orig_shape)

    n_rows = total // lanes
    x2d = x.reshape(n_rows, lanes)       # reshape of a contiguous array: free

    itemsize = dtype.itemsize
    # dtype-aware sublane packing: 8 for f32, 16 for bf16, 32 for int8/fp8.
    sublane = max(8, 32 // itemsize)

    gen = _tpu_generation()
    # ~4 MiB tiles on v6e/v7x (double-buffered in+out = 16 MiB, under the 32 MiB
    # scoped default but set an explicit 40 MiB limit for headroom); ~2 MiB on
    # v5e to stay inside its 16 MiB scoped-VMEM default.
    target_tile_bytes = (2 << 20) if gen == 5 else (4 << 20)
    vmem_limit_bytes = None if target_tile_bytes <= (2 << 20) else (40 << 20)

    if n_rows <= sublane:
        tile_rows = n_rows               # full-extent block (any size allowed)
    else:
        max_rows = max(1, target_tile_bytes // (lanes * itemsize))
        tile_rows = min(n_rows, max_rows)
        tile_rows = max(sublane, (tile_rows // sublane) * sublane)
        if gen >= 7:
            # v7x has 2 TensorCores: keep >= 2 grid steps so the "parallel"
            # axis shards across both cores for mid-size inputs.
            half = -(-n_rows // 2)                        # ceil(n_rows / 2)
            half_aligned = -(-half // sublane) * sublane  # round up to sublane
            tile_rows = max(sublane, min(tile_rows, half_aligned))

    out2d = _affine_bulk(x2d, gain_f32, bias_f32, tile_rows, vmem_limit_bytes)
    return out2d.reshape(orig_shape)


if __name__ == "__main__":
    key = jax.random.PRNGKey(0)
    # NCHW input, same convention as the PyTorch module would receive.
    x = jax.random.normal(key, (2, 4, 16, 16), dtype=jnp.float32)

    # Deterministic parameter init, matching nn.Parameter(torch.ones(1)) /
    # nn.Parameter(torch.zeros(1)).
    gain = jnp.ones((1,), dtype=jnp.float32)
    bias = jnp.zeros((1,), dtype=jnp.float32)

    y = jax.block_until_ready(affine(x, gain, bias))
    y_ref = x * gain[0] + bias[0]
    assert y.shape == x.shape and y.dtype == x.dtype
    assert jnp.allclose(y, y_ref, atol=1e-6, rtol=1e-6)

    # Secondary correctness check with non-trivial parameters.
    gain2 = jnp.full((1,), 1.5, dtype=jnp.float32)
    bias2 = jnp.full((1,), -0.25, dtype=jnp.float32)
    y2 = jax.block_until_ready(affine(x, gain2, bias2))
    y2_ref = x * gain2[0] + bias2[0]
    assert jnp.allclose(y2, y2_ref, atol=1e-6, rtol=1e-6)

    print("KERNEL_OK")
</pallas_src>

<mosaic_0001>
module attributes {stable_mosaic.version = 11 : i64} {
  func.func @_affine_kernel(%arg0: i32, %arg1: memref<1xf32, #tpu.memory_space<smem>>, %arg2: memref<1xf32, #tpu.memory_space<smem>>, %arg3: memref<2x1024xf32, #tpu.memory_space<vmem>>, %arg4: memref<2x1024xf32, #tpu.memory_space<vmem>>) attributes {dimension_semantics = [#tpu.dimension_semantics<parallel>], iteration_bounds = array<i64: 1>, scalar_prefetch = 0 : i64, scratch_operands = 0 : i64, tpu.core_type = #tpu.core_type<tc>, window_params = [{transform_indices = @transform_0, window_bounds = array<i64: 1>}, {transform_indices = @transform_1, window_bounds = array<i64: 1>}, {transform_indices = @transform_2, window_bounds = array<i64: 2, 1024>}, {transform_indices = @transform_3, window_bounds = array<i64: 2, 1024>}]} {
    %c0 = arith.constant 0 : index
    %0 = memref.load %arg1[%c0] : memref<1xf32, #tpu.memory_space<smem>>
    %c0_0 = arith.constant 0 : index
    %1 = memref.load %arg2[%c0_0] : memref<1xf32, #tpu.memory_space<smem>>
    %c0_1 = arith.constant 0 : index
    %c0_2 = arith.constant 0 : index
    %2 = vector.load %arg3[%c0_1, %c0_2] : memref<2x1024xf32, #tpu.memory_space<vmem>>, vector<2x1024xf32>
    %3 = vector.broadcast %0 : f32 to vector<2x1024xf32>
    %4 = arith.mulf %2, %3 : vector<2x1024xf32>
    %5 = vector.broadcast %1 : f32 to vector<2x1024xf32>
    %6 = arith.addf %4, %5 : vector<2x1024xf32>
    %c0_3 = arith.constant 0 : index
    %c0_4 = arith.constant 0 : index
    %7 = vector.load %arg4[%c0_3, %c0_4] : memref<2x1024xf32, #tpu.memory_space<vmem>>, vector<2x1024xf32>
    tpu.vector_store %arg4[%c0_3, %c0_4], %6 {strides = array<i32>} : memref<2x1024xf32, #tpu.memory_space<vmem>>, vector<2x1024xf32>,
    return
  }
  func.func @transform_0(%arg0: i32) -> i32 {
    %c0_i32 = arith.constant 0 : i32
    %c0_i32_0 = arith.constant 0 : i32
    return %c0_i32 : i32
  }
  func.func @transform_1(%arg0: i32) -> i32 {
    %c0_i32 = arith.constant 0 : i32
    %c0_i32_0 = arith.constant 0 : i32
    return %c0_i32 : i32
  }
  func.func @transform_2(%arg0: i32) -> (i32, i32) {
    %c0_i32 = arith.constant 0 : i32
    %c0_i32_0 = arith.constant 0 : i32
    return %arg0, %c0_i32 : i32, i32
  }
  func.func @transform_3(%arg0: i32) -> (i32, i32) {
    %c0_i32 = arith.constant 0 : i32
    %c0_i32_0 = arith.constant 0 : i32
    return %arg0, %c0_i32 : i32, i32
  }
}

</mosaic_0001>

<llo_original>
// kernel: affine.1
$region0: #{affine.1}
  #allocation0 [shape = 'u32[]', space=smem, size = 0x4, offset = 0x4, fixed_abs, tag = 'smem constant byte address 0x4 - core index']
  #allocation1 [shape = 'u32[144,128]{1,0:T(1,128)}', space=vmem, size = 0x12000, scoped, tag = 'internal scratch']
  #allocation2 [shape = 'f32[1]{0:T(128)S(6)}', space=smem, size = 0x200, scoped, tag = 'scoped memory for affine.1']
  #allocation3 [shape = 'f32[1]{0:T(128)S(6)}', space=smem, size = 0x200, scoped, tag = 'scoped memory for affine.1']
  %s0 = inlined_call_operand.<no memory space> [shape: f32[1], index: 0, kind: input, shape index: {}]
  %s1 = inlined_call_operand.<no memory space> [shape: f32[1], index: 1, kind: input, shape index: {}]
  %s2 = inlined_call_operand.vmem [shape: f32[2,1024], index: 2, kind: input, shape index: {}]
  %s3 = inlined_call_operand.vmem [shape: f32[2,1024], index: 3, kind: output, shape index: {}]
  %s4 = sld [smem:[#allocation0]]
  $region22: #{affine.1} parent=0
    _
  %s6 = ssub.s32 1, %s4
  %s7 = scalar_select 0, %s6, %s4
  %8 = sst [smem:[#allocation2]] %s0
  %9 = sst [smem:[#allocation3]] %s1
  // Predicated region
  $region2: #{affine.1} parent=0 // pred_check
    _
  $region3: #{affine.1} parent=0 // pred_check_branch
    %11 = sbr.rel (0) target = $region5
  $region4: #{affine.1} parent=0 // pred_region
    _
  $region5: #{affine.1} parent=0 // pred_fallthru
    _
  // Predicated region
  $region6: #{affine.1} parent=0 // pred_check
    _
  $region7: #{affine.1} parent=0 // pred_check_branch
    %13 = sbr.rel (0) target = $region9
  $region8: #{affine.1} parent=0 // pred_region
    _
  $region9: #{affine.1} parent=0 // pred_fallthru
    _
  // Predicated region
  $region10: #{affine.1} parent=0 // pred_check
    _
  $region11: #{affine.1} parent=0 // pred_check_branch
    %15 = sbr.rel (0) target = $region13
  $region12: #{affine.1} parent=0 // pred_region
    _
  $region13: #{affine.1} parent=0 // pred_fallthru
    _
  %s16 = sld [smem:[#allocation2]]
  %s17 = sld [smem:[#allocation3]]
  %v18 = vld [vmem:[%s2] sm:$0xff]
  %v19 = vld [vmem:[%s2 + $0x8] sm:$0xff]
  %v20 = vstv %s16
  %v21 = vmul.f32 %v18, %v20
  %v22 = vmul.f32 %v19, %v20
  %v23 = vstv %s17
  %v24 = vadd.f32 %v21, %v23
  %v25 = vadd.f32 %v22, %v23
  %26 = vst [vmem:[%s3] sm:$0xff] %v24
  %27 = vst [vmem:[%s3 + $0x8] sm:$0xff] %v25
  // Predicated region
  $region14: #{affine.1} parent=0 // pred_check
    _
  $region15: #{affine.1} parent=0 // pred_check_branch
    %29 = sbr.rel (0) target = $region17
  $region16: #{affine.1} parent=0 // pred_region
    _
  $region17: #{affine.1} parent=0 // pred_fallthru
    _
  // Predicated region
  $region18: #{affine.1} parent=0 // pred_check
    _
  $region19: #{affine.1} parent=0 // pred_check_branch
    %31 = sbr.rel (0) target = $region21
  $region20: #{affine.1} parent=0 // pred_region
    _
  $region21: #{affine.1} parent=0 // pred_fallthru
    _

</llo_original>
